<compile_context>
chip_gen: v6e
topology: v6e:2x2x1
jax: 0.10.0
libtpu: 0.0.40
codegen_flags: <defaults>
</compile_context>

<pallas_src>
import jax
import jax.numpy as jnp
from jax.experimental import pallas as pl
from jax.experimental.pallas import tpu as pltpu

# ----------------------------- config ---------------------------------------
VOCAB = 100
SEQ = 8              # sentence_len
HIDDEN = 128         # hidden_size (128 -> lane-dense activations/weights)
EMB = HIDDEN // 2    # nn.Embedding(vocab, hidden // 2)
N_CLASSES = 4
N_MID = 5            # the 5 stacked Linear(hidden, hidden) layers
BN_EPS = 1e-5        # PyTorch BatchNorm1d default
LANE = 128           # classifier head padded to a full lane width


# ------------------------- fused Pallas kernel -------------------------------
def _bn_relu(h, g, b):
    """BatchNorm1d (batch statistics, biased variance) + ReLU, in f32."""
    mean = jnp.mean(h, axis=0, keepdims=True)
    var = jnp.mean(jnp.square(h - mean), axis=0, keepdims=True)
    h = (h - mean) * jax.lax.rsqrt(var + BN_EPS) * g + b
    return jnp.maximum(h, 0.0)


def _textmlp_kernel(x_ref,
                    w1_ref, b1_ref, g1_ref, be1_ref,
                    w2_ref, b2_ref, g2_ref, be2_ref,
                    wm_ref, bm_ref, g3_ref, be3_ref,
                    wh_ref, bh_ref,
                    o_ref):
    # Linear(seq*emb -> hidden) + BN + ReLU
    h = jnp.dot(x_ref[...], w1_ref[...],
                preferred_element_type=jnp.float32) + b1_ref[...]
    h = _bn_relu(h, g1_ref[...], be1_ref[...])

    # Linear(hidden -> hidden) + BN + ReLU
    h = jnp.dot(h, w2_ref[...],
                preferred_element_type=jnp.float32) + b2_ref[...]
    h = _bn_relu(h, g2_ref[...], be2_ref[...])

    # 5 stacked Linear(hidden -> hidden), no activation between them
    for i in range(N_MID):
        h = jnp.dot(h, wm_ref[i],
                    preferred_element_type=jnp.float32) + bm_ref[i]

    # BN + ReLU
    h = _bn_relu(h, g3_ref[...], be3_ref[...])

    # classifier head into a lane-dense (B, 128) padded buffer
    o_ref[...] = (jnp.dot(h, wh_ref[...],
                          preferred_element_type=jnp.float32)
                  + bh_ref[...]).astype(o_ref.dtype)


def textmlp_forward(params, input_ids):
    B = input_ids.shape[0]

    # nn.Embedding + nn.Flatten (gather done as XLA glue; see TODO above)
    emb = jnp.take(params["emb_w"], input_ids, axis=0)       # (B, SEQ, EMB)
    x = emb.reshape(B, SEQ * EMB)                             # (B, SEQ*EMB)

    vmem = pl.BlockSpec(memory_space=pltpu.MemorySpace.VMEM)  # whole array in VMEM
    out_pad = pl.pallas_call(
        _textmlp_kernel,
        out_shape=jax.ShapeDtypeStruct((B, LANE), jnp.float32),
        in_specs=[vmem] * 15,
        out_specs=vmem,
    )(x,
      params["w1"], params["b1"], params["bn1_g"], params["bn1_b"],
      params["w2"], params["b2"], params["bn2_g"], params["bn2_b"],
      params["w_mid"], params["b_mid"], params["bn3_g"], params["bn3_b"],
      params["wh_pad"], params["bh_pad"])

    return out_pad[:, :N_CLASSES]                             # (B, n_classes)


# ------------------------- parameter init -----------------------------------
def init_params(key):
    keys = iter(jax.random.split(key, 16))

    def w(shape, scale=0.05):
        return scale * jax.random.normal(next(keys), shape, jnp.float32)

    def zeros(*s):
        return jnp.zeros(s, jnp.float32)

    def ones(*s):
        return jnp.ones(s, jnp.float32)

    # classifier head, zero-padded to a full 128-lane output
    wh = w((HIDDEN, N_CLASSES))
    bh = w((1, N_CLASSES))
    wh_pad = jnp.zeros((HIDDEN, LANE), jnp.float32).at[:, :N_CLASSES].set(wh)
    bh_pad = jnp.zeros((1, LANE), jnp.float32).at[:, :N_CLASSES].set(bh)

    return {
        "emb_w": w((VOCAB, EMB), scale=1.0),          # torch Embedding ~ N(0, 1)
        "w1": w((SEQ * EMB, HIDDEN)), "b1": w((1, HIDDEN)),
        "bn1_g": ones(1, HIDDEN), "bn1_b": zeros(1, HIDDEN),
        "w2": w((HIDDEN, HIDDEN)), "b2": w((1, HIDDEN)),
        "bn2_g": ones(1, HIDDEN), "bn2_b": zeros(1, HIDDEN),
        "w_mid": w((N_MID, HIDDEN, HIDDEN)), "b_mid": w((N_MID, 1, HIDDEN)),
        "bn3_g": ones(1, HIDDEN), "bn3_b": zeros(1, HIDDEN),
        "wh_pad": wh_pad, "bh_pad": bh_pad,
    }


# -------------------------------- main ---------------------------------------
if __name__ == "__main__":
    root = jax.random.PRNGKey(0)
    pkey, ikey = jax.random.split(root)
    params = init_params(pkey)

    B = 8
    input_ids = jax.random.randint(ikey, (B, SEQ), 0, VOCAB, dtype=jnp.int32)

    fwd = jax.jit(textmlp_forward)
    logits = jax.block_until_ready(fwd(params, input_ids))

    assert logits.shape == (B, N_CLASSES)
    assert bool(jnp.all(jnp.isfinite(logits)))
    print("KERNEL_OK")
</pallas_src>

<mosaic_0001>
module attributes {stable_mosaic.version = 11 : i64} {
  func.func @_textmlp_kernel(%arg0: memref<8x512xf32, #tpu.memory_space<vmem>>, %arg1: memref<512x128xf32, #tpu.memory_space<vmem>>, %arg2: memref<1x128xf32, #tpu.memory_space<vmem>>, %arg3: memref<1x128xf32, #tpu.memory_space<vmem>>, %arg4: memref<1x128xf32, #tpu.memory_space<vmem>>, %arg5: memref<128x128xf32, #tpu.memory_space<vmem>>, %arg6: memref<1x128xf32, #tpu.memory_space<vmem>>, %arg7: memref<1x128xf32, #tpu.memory_space<vmem>>, %arg8: memref<1x128xf32, #tpu.memory_space<vmem>>, %arg9: memref<5x128x128xf32, #tpu.memory_space<vmem>>, %arg10: memref<5x1x128xf32, #tpu.memory_space<vmem>>, %arg11: memref<1x128xf32, #tpu.memory_space<vmem>>, %arg12: memref<1x128xf32, #tpu.memory_space<vmem>>, %arg13: memref<128x128xf32, #tpu.memory_space<vmem>>, %arg14: memref<1x128xf32, #tpu.memory_space<vmem>>, %arg15: memref<8x128xf32, #tpu.memory_space<vmem>>) attributes {dimension_semantics = [], scalar_prefetch = 0 : i64, scratch_operands = 0 : i64, tpu.core_type = #tpu.core_type<tc>} {
    %c0 = arith.constant 0 : index
    %c0_0 = arith.constant 0 : index
    %0 = vector.load %arg0[%c0, %c0_0] : memref<8x512xf32, #tpu.memory_space<vmem>>, vector<8x512xf32>
    %c0_1 = arith.constant 0 : index
    %c0_2 = arith.constant 0 : index
    %1 = vector.load %arg1[%c0_1, %c0_2] : memref<512x128xf32, #tpu.memory_space<vmem>>, vector<512x128xf32>
    %cst = arith.constant dense<0.000000e+00> : vector<8x128xf32>
    %2 = tpu.matmul %0, %1, %cst {dimension_numbers = #tpu.dot_dimension_numbers<[1], [0], [0], [1], [0, 0, 1, 1], [], []>} : vector<8x512xf32>, vector<512x128xf32>, vector<8x128xf32> -> vector<8x128xf32>
    %c0_3 = arith.constant 0 : index
    %c0_4 = arith.constant 0 : index
    %3 = vector.load %arg2[%c0_3, %c0_4] : memref<1x128xf32, #tpu.memory_space<vmem>>, vector<1x128xf32>
    %4 = vector.broadcast %3 : vector<1x128xf32> to vector<8x128xf32>
    %5 = arith.addf %2, %4 : vector<8x128xf32>
    %c0_5 = arith.constant 0 : index
    %c0_6 = arith.constant 0 : index
    %6 = vector.load %arg3[%c0_5, %c0_6] : memref<1x128xf32, #tpu.memory_space<vmem>>, vector<1x128xf32>
    %c0_7 = arith.constant 0 : index
    %c0_8 = arith.constant 0 : index
    %7 = vector.load %arg4[%c0_7, %c0_8] : memref<1x128xf32, #tpu.memory_space<vmem>>, vector<1x128xf32>
    %cst_9 = arith.constant dense<0.000000e+00> : vector<128xf32>
    %8 = vector.multi_reduction <add>, %5, %cst_9 [0] : vector<8x128xf32> to vector<128xf32>
    %9 = vector.shape_cast %8 : vector<128xf32> to vector<1x128xf32>
    %cst_10 = arith.constant 8.000000e+00 : f32
    %10 = vector.broadcast %cst_10 : f32 to vector<1x128xf32>
    %11 = arith.divf %9, %10 : vector<1x128xf32>
    %12 = vector.broadcast %11 : vector<1x128xf32> to vector<8x128xf32>
    %13 = arith.subf %5, %12 : vector<8x128xf32>
    %14 = arith.mulf %13, %13 : vector<8x128xf32>
    %cst_11 = arith.constant dense<0.000000e+00> : vector<128xf32>
    %15 = vector.multi_reduction <add>, %14, %cst_11 [0] : vector<8x128xf32> to vector<128xf32>
    %16 = vector.shape_cast %15 : vector<128xf32> to vector<1x128xf32>
    %cst_12 = arith.constant 8.000000e+00 : f32
    %17 = vector.broadcast %cst_12 : f32 to vector<1x128xf32>
    %18 = arith.divf %16, %17 : vector<1x128xf32>
    %19 = vector.broadcast %11 : vector<1x128xf32> to vector<8x128xf32>
    %20 = arith.subf %5, %19 : vector<8x128xf32>
    %cst_13 = arith.constant 9.99999974E-6 : f32
    %21 = vector.broadcast %cst_13 : f32 to vector<1x128xf32>
    %22 = arith.addf %18, %21 : vector<1x128xf32>
    %23 = math.rsqrt %22 : vector<1x128xf32>
    %24 = vector.broadcast %23 : vector<1x128xf32> to vector<8x128xf32>
    %25 = arith.mulf %20, %24 : vector<8x128xf32>
    %26 = vector.broadcast %6 : vector<1x128xf32> to vector<8x128xf32>
    %27 = arith.mulf %25, %26 : vector<8x128xf32>
    %28 = vector.broadcast %7 : vector<1x128xf32> to vector<8x128xf32>
    %29 = arith.addf %27, %28 : vector<8x128xf32>
    %cst_14 = arith.constant 0.000000e+00 : f32
    %30 = vector.broadcast %cst_14 : f32 to vector<8x128xf32>
    %31 = arith.maximumf %29, %30 : vector<8x128xf32>
    %c0_15 = arith.constant 0 : index
    %c0_16 = arith.constant 0 : index
    %32 = vector.load %arg5[%c0_15, %c0_16] : memref<128x128xf32, #tpu.memory_space<vmem>>, vector<128x128xf32>
    %cst_17 = arith.constant dense<0.000000e+00> : vector<8x128xf32>
    %33 = tpu.matmul %31, %32, %cst_17 {dimension_numbers = #tpu.dot_dimension_numbers<[1], [0], [0], [1], [0, 0, 1, 1], [], []>} : vector<8x128xf32>, vector<128x128xf32>, vector<8x128xf32> -> vector<8x128xf32>
    %c0_18 = arith.constant 0 : index
    %c0_19 = arith.constant 0 : index
    %34 = vector.load %arg6[%c0_18, %c0_19] : memref<1x128xf32, #tpu.memory_space<vmem>>, vector<1x128xf32>
    %35 = vector.broadcast %34 : vector<1x128xf32> to vector<8x128xf32>
    %36 = arith.addf %33, %35 : vector<8x128xf32>
    %c0_20 = arith.constant 0 : index
    %c0_21 = arith.constant 0 : index
    %37 = vector.load %arg7[%c0_20, %c0_21] : memref<1x128xf32, #tpu.memory_space<vmem>>, vector<1x128xf32>
    %c0_22 = arith.constant 0 : index
    %c0_23 = arith.constant 0 : index
    %38 = vector.load %arg8[%c0_22, %c0_23] : memref<1x128xf32, #tpu.memory_space<vmem>>, vector<1x128xf32>
    %cst_24 = arith.constant dense<0.000000e+00> : vector<128xf32>
    %39 = vector.multi_reduction <add>, %36, %cst_24 [0] : vector<8x128xf32> to vector<128xf32>
    %40 = vector.shape_cast %39 : vector<128xf32> to vector<1x128xf32>
    %cst_25 = arith.constant 8.000000e+00 : f32
    %41 = vector.broadcast %cst_25 : f32 to vector<1x128xf32>
    %42 = arith.divf %40, %41 : vector<1x128xf32>
    %43 = vector.broadcast %42 : vector<1x128xf32> to vector<8x128xf32>
    %44 = arith.subf %36, %43 : vector<8x128xf32>
    %45 = arith.mulf %44, %44 : vector<8x128xf32>
    %cst_26 = arith.constant dense<0.000000e+00> : vector<128xf32>
    %46 = vector.multi_reduction <add>, %45, %cst_26 [0] : vector<8x128xf32> to vector<128xf32>
    %47 = vector.shape_cast %46 : vector<128xf32> to vector<1x128xf32>
    %cst_27 = arith.constant 8.000000e+00 : f32
    %48 = vector.broadcast %cst_27 : f32 to vector<1x128xf32>
    %49 = arith.divf %47, %48 : vector<1x128xf32>
    %50 = vector.broadcast %42 : vector<1x128xf32> to vector<8x128xf32>
    %51 = arith.subf %36, %50 : vector<8x128xf32>
    %cst_28 = arith.constant 9.99999974E-6 : f32
    %52 = vector.broadcast %cst_28 : f32 to vector<1x128xf32>
    %53 = arith.addf %49, %52 : vector<1x128xf32>
    %54 = math.rsqrt %53 : vector<1x128xf32>
    %55 = vector.broadcast %54 : vector<1x128xf32> to vector<8x128xf32>
    %56 = arith.mulf %51, %55 : vector<8x128xf32>
    %57 = vector.broadcast %37 : vector<1x128xf32> to vector<8x128xf32>
    %58 = arith.mulf %56, %57 : vector<8x128xf32>
    %59 = vector.broadcast %38 : vector<1x128xf32> to vector<8x128xf32>
    %60 = arith.addf %58, %59 : vector<8x128xf32>
    %cst_29 = arith.constant 0.000000e+00 : f32
    %61 = vector.broadcast %cst_29 : f32 to vector<8x128xf32>
    %62 = arith.maximumf %60, %61 : vector<8x128xf32>
    %c0_30 = arith.constant 0 : index
    %c0_31 = arith.constant 0 : index
    %c0_32 = arith.constant 0 : index
    %63 = vector.load %arg9[%c0_30, %c0_31, %c0_32] : memref<5x128x128xf32, #tpu.memory_space<vmem>>, vector<1x128x128xf32>
    %64 = vector.shape_cast %63 : vector<1x128x128xf32> to vector<128x128xf32>
    %cst_33 = arith.constant dense<0.000000e+00> : vector<8x128xf32>
    %65 = tpu.matmul %62, %64, %cst_33 {dimension_numbers = #tpu.dot_dimension_numbers<[1], [0], [0], [1], [0, 0, 1, 1], [], []>} : vector<8x128xf32>, vector<128x128xf32>, vector<8x128xf32> -> vector<8x128xf32>
    %c0_34 = arith.constant 0 : index
    %c0_35 = arith.constant 0 : index
    %c0_36 = arith.constant 0 : index
    %66 = vector.load %arg10[%c0_34, %c0_35, %c0_36] : memref<5x1x128xf32, #tpu.memory_space<vmem>>, vector<1x1x128xf32>
    %67 = vector.shape_cast %66 : vector<1x1x128xf32> to vector<1x128xf32>
    %68 = vector.broadcast %67 : vector<1x128xf32> to vector<8x128xf32>
    %69 = arith.addf %65, %68 : vector<8x128xf32>
    %c1 = arith.constant 1 : index
    %c0_37 = arith.constant 0 : index
    %c0_38 = arith.constant 0 : index
    %70 = vector.load %arg9[%c1, %c0_37, %c0_38] : memref<5x128x128xf32, #tpu.memory_space<vmem>>, vector<1x128x128xf32>
    %71 = vector.shape_cast %70 : vector<1x128x128xf32> to vector<128x128xf32>
    %cst_39 = arith.constant dense<0.000000e+00> : vector<8x128xf32>
    %72 = tpu.matmul %69, %71, %cst_39 {dimension_numbers = #tpu.dot_dimension_numbers<[1], [0], [0], [1], [0, 0, 1, 1], [], []>} : vector<8x128xf32>, vector<128x128xf32>, vector<8x128xf32> -> vector<8x128xf32>
    %c1_40 = arith.constant 1 : index
    %c0_41 = arith.constant 0 : index
    %c0_42 = arith.constant 0 : index
    %73 = vector.load %arg10[%c1_40, %c0_41, %c0_42] : memref<5x1x128xf32, #tpu.memory_space<vmem>>, vector<1x1x128xf32>
    %74 = vector.shape_cast %73 : vector<1x1x128xf32> to vector<1x128xf32>
    %75 = vector.broadcast %74 : vector<1x128xf32> to vector<8x128xf32>
    %76 = arith.addf %72, %75 : vector<8x128xf32>
    %c2 = arith.constant 2 : index
    %c0_43 = arith.constant 0 : index
    %c0_44 = arith.constant 0 : index
    %77 = vector.load %arg9[%c2, %c0_43, %c0_44] : memref<5x128x128xf32, #tpu.memory_space<vmem>>, vector<1x128x128xf32>
    %78 = vector.shape_cast %77 : vector<1x128x128xf32> to vector<128x128xf32>
    %cst_45 = arith.constant dense<0.000000e+00> : vector<8x128xf32>
    %79 = tpu.matmul %76, %78, %cst_45 {dimension_numbers = #tpu.dot_dimension_numbers<[1], [0], [0], [1], [0, 0, 1, 1], [], []>} : vector<8x128xf32>, vector<128x128xf32>, vector<8x128xf32> -> vector<8x128xf32>
    %c2_46 = arith.constant 2 : index
    %c0_47 = arith.constant 0 : index
    %c0_48 = arith.constant 0 : index
    %80 = vector.load %arg10[%c2_46, %c0_47, %c0_48] : memref<5x1x128xf32, #tpu.memory_space<vmem>>, vector<1x1x128xf32>
    %81 = vector.shape_cast %80 : vector<1x1x128xf32> to vector<1x128xf32>
    %82 = vector.broadcast %81 : vector<1x128xf32> to vector<8x128xf32>
    %83 = arith.addf %79, %82 : vector<8x128xf32>
    %c3 = arith.constant 3 : index
    %c0_49 = arith.constant 0 : index
    %c0_50 = arith.constant 0 : index
    %84 = vector.load %arg9[%c3, %c0_49, %c0_50] : memref<5x128x128xf32, #tpu.memory_space<vmem>>, vector<1x128x128xf32>
    %85 = vector.shape_cast %84 : vector<1x128x128xf32> to vector<128x128xf32>
    %cst_51 = arith.constant dense<0.000000e+00> : vector<8x128xf32>
    %86 = tpu.matmul %83, %85, %cst_51 {dimension_numbers = #tpu.dot_dimension_numbers<[1], [0], [0], [1], [0, 0, 1, 1], [], []>} : vector<8x128xf32>, vector<128x128xf32>, vector<8x128xf32> -> vector<8x128xf32>
    %c3_52 = arith.constant 3 : index
    %c0_53 = arith.constant 0 : index
    %c0_54 = arith.constant 0 : index
    %87 = vector.load %arg10[%c3_52, %c0_53, %c0_54] : memref<5x1x128xf32, #tpu.memory_space<vmem>>, vector<1x1x128xf32>
    %88 = vector.shape_cast %87 : vector<1x1x128xf32> to vector<1x128xf32>
    %89 = vector.broadcast %88 : vector<1x128xf32> to vector<8x128xf32>
    %90 = arith.addf %86, %89 : vector<8x128xf32>
    %c4 = arith.constant 4 : index
    %c0_55 = arith.constant 0 : index
    %c0_56 = arith.constant 0 : index
    %91 = vector.load %arg9[%c4, %c0_55, %c0_56] : memref<5x128x128xf32, #tpu.memory_space<vmem>>, vector<1x128x128xf32>
    %92 = vector.shape_cast %91 : vector<1x128x128xf32> to vector<128x128xf32>
    %cst_57 = arith.constant dense<0.000000e+00> : vector<8x128xf32>
    %93 = tpu.matmul %90, %92, %cst_57 {dimension_numbers = #tpu.dot_dimension_numbers<[1], [0], [0], [1], [0, 0, 1, 1], [], []>} : vector<8x128xf32>, vector<128x128xf32>, vector<8x128xf32> -> vector<8x128xf32>
    %c4_58 = arith.constant 4 : index
    %c0_59 = arith.constant 0 : index
    %c0_60 = arith.constant 0 : index
    %94 = vector.load %arg10[%c4_58, %c0_59, %c0_60] : memref<5x1x128xf32, #tpu.memory_space<vmem>>, vector<1x1x128xf32>
    %95 = vector.shape_cast %94 : vector<1x1x128xf32> to vector<1x128xf32>
    %96 = vector.broadcast %95 : vector<1x128xf32> to vector<8x128xf32>
    %97 = arith.addf %93, %96 : vector<8x128xf32>
    %c0_61 = arith.constant 0 : index
    %c0_62 = arith.constant 0 : index
    %98 = vector.load %arg11[%c0_61, %c0_62] : memref<1x128xf32, #tpu.memory_space<vmem>>, vector<1x128xf32>
    %c0_63 = arith.constant 0 : index
    %c0_64 = arith.constant 0 : index
    %99 = vector.load %arg12[%c0_63, %c0_64] : memref<1x128xf32, #tpu.memory_space<vmem>>, vector<1x128xf32>
    %cst_65 = arith.constant dense<0.000000e+00> : vector<128xf32>
    %100 = vector.multi_reduction <add>, %97, %cst_65 [0] : vector<8x128xf32> to vector<128xf32>
    %101 = vector.shape_cast %100 : vector<128xf32> to vector<1x128xf32>
    %cst_66 = arith.constant 8.000000e+00 : f32
    %102 = vector.broadcast %cst_66 : f32 to vector<1x128xf32>
    %103 = arith.divf %101, %102 : vector<1x128xf32>
    %104 = vector.broadcast %103 : vector<1x128xf32> to vector<8x128xf32>
    %105 = arith.subf %97, %104 : vector<8x128xf32>
    %106 = arith.mulf %105, %105 : vector<8x128xf32>
    %cst_67 = arith.constant dense<0.000000e+00> : vector<128xf32>
    %107 = vector.multi_reduction <add>, %106, %cst_67 [0] : vector<8x128xf32> to vector<128xf32>
    %108 = vector.shape_cast %107 : vector<128xf32> to vector<1x128xf32>
    %cst_68 = arith.constant 8.000000e+00 : f32
    %109 = vector.broadcast %cst_68 : f32 to vector<1x128xf32>
    %110 = arith.divf %108, %109 : vector<1x128xf32>
    %111 = vector.broadcast %103 : vector<1x128xf32> to vector<8x128xf32>
    %112 = arith.subf %97, %111 : vector<8x128xf32>
    %cst_69 = arith.constant 9.99999974E-6 : f32
    %113 = vector.broadcast %cst_69 : f32 to vector<1x128xf32>
    %114 = arith.addf %110, %113 : vector<1x128xf32>
    %115 = math.rsqrt %114 : vector<1x128xf32>
    %116 = vector.broadcast %115 : vector<1x128xf32> to vector<8x128xf32>
    %117 = arith.mulf %112, %116 : vector<8x128xf32>
    %118 = vector.broadcast %98 : vector<1x128xf32> to vector<8x128xf32>
    %119 = arith.mulf %117, %118 : vector<8x128xf32>
    %120 = vector.broadcast %99 : vector<1x128xf32> to vector<8x128xf32>
    %121 = arith.addf %119, %120 : vector<8x128xf32>
    %cst_70 = arith.constant 0.000000e+00 : f32
    %122 = vector.broadcast %cst_70 : f32 to vector<8x128xf32>
    %123 = arith.maximumf %121, %122 : vector<8x128xf32>
    %c0_71 = arith.constant 0 : index
    %c0_72 = arith.constant 0 : index
    %124 = vector.load %arg13[%c0_71, %c0_72] : memref<128x128xf32, #tpu.memory_space<vmem>>, vector<128x128xf32>
    %cst_73 = arith.constant dense<0.000000e+00> : vector<8x128xf32>
    %125 = tpu.matmul %123, %124, %cst_73 {dimension_numbers = #tpu.dot_dimension_numbers<[1], [0], [0], [1], [0, 0, 1, 1], [], []>} : vector<8x128xf32>, vector<128x128xf32>, vector<8x128xf32> -> vector<8x128xf32>
    %c0_74 = arith.constant 0 : index
    %c0_75 = arith.constant 0 : index
    %126 = vector.load %arg14[%c0_74, %c0_75] : memref<1x128xf32, #tpu.memory_space<vmem>>, vector<1x128xf32>
    %127 = vector.broadcast %126 : vector<1x128xf32> to vector<8x128xf32>
    %128 = arith.addf %125, %127 : vector<8x128xf32>
    %c0_76 = arith.constant 0 : index
    %c0_77 = arith.constant 0 : index
    %129 = vector.load %arg15[%c0_76, %c0_77] : memref<8x128xf32, #tpu.memory_space<vmem>>, vector<8x128xf32>
    tpu.vector_store %arg15[%c0_76, %c0_77], %128 {strides = array<i32>} : memref<8x128xf32, #tpu.memory_space<vmem>>, vector<8x128xf32>,
    return
  }
}

</mosaic_0001>

<llo_original>
// kernel: textmlp_forward.1
$region0: #{textmlp_forward.1}
  #allocation0 [shape = 'u32[]', space=smem, size = 0x4, offset = 0x4, fixed_abs, tag = 'smem constant byte address 0x4 - core index']
  #allocation1 [shape = 'u32[144,128]{1,0:T(1,128)}', space=vmem, size = 0x12000, scoped, tag = 'internal scratch']
  %s0 = inlined_call_operand.vmem [shape: f32[8,512], index: 0, kind: input, shape index: {}]
  %s1 = inlined_call_operand.hbm [shape: f32[512,128], index: 1, kind: input, shape index: {}]
  %s2 = inlined_call_operand.vmem [shape: f32[1,128], index: 2, kind: input, shape index: {}]
  %s3 = inlined_call_operand.vmem [shape: f32[1,128], index: 3, kind: input, shape index: {}]
  %s4 = inlined_call_operand.vmem [shape: f32[1,128], index: 4, kind: input, shape index: {}]
  %s5 = inlined_call_operand.vmem [shape: f32[128,128], index: 5, kind: input, shape index: {}]
  %s6 = inlined_call_operand.vmem [shape: f32[1,128], index: 6, kind: input, shape index: {}]
  %s7 = inlined_call_operand.vmem [shape: f32[1,128], index: 7, kind: input, shape index: {}]
  %s8 = inlined_call_operand.vmem [shape: f32[1,128], index: 8, kind: input, shape index: {}]
  %s9 = inlined_call_operand.vmem [shape: f32[5,128,128], index: 9, kind: input, shape index: {}]
  %s10 = inlined_call_operand.vmem [shape: f32[5,1,128], index: 10, kind: input, shape index: {}]
  %s11 = inlined_call_operand.vmem [shape: f32[1,128], index: 11, kind: input, shape index: {}]
  %s12 = inlined_call_operand.vmem [shape: f32[1,128], index: 12, kind: input, shape index: {}]
  %s13 = inlined_call_operand.vmem [shape: f32[128,128], index: 13, kind: input, shape index: {}]
  %s14 = inlined_call_operand.vmem [shape: f32[1,128], index: 14, kind: input, shape index: {}]
  %s15 = inlined_call_operand.vmem [shape: f32[8,128], index: 15, kind: output, shape index: {}]
  %s16 = sld [smem:[#allocation0]]
  $region74: #{textmlp_forward.1} parent=0
    _
  %s18 = ssub.s32 1, %s16
  %s19 = scalar_select 0, %s18, %s16
  $region1: #{textmlp_forward.1} parent=0
    #allocation2 [shape = 'u8[262144]{0}', space=vmem, size = 0x40000, scoped, tag = 'input window, operand 1, single buffered']
    #allocation3 [shape = 's32[1]{0}', space=sflag, size = 0x4, scoped, tag = 'scoped memory for textmlp_forward.1']
    %20 = vsyncpa [#allocation3], 0
    // Predicated region
    $region2: #{textmlp_forward.1} parent=1 // pred_check
      _
    $region3: #{textmlp_forward.1} parent=1 // pred_check_branch
      %22 = sbr.rel (0) target = $region5
    $region4: #{textmlp_forward.1} parent=1 // pred_region
      _
    $region5: #{textmlp_forward.1} parent=1 // pred_fallthru
      _
    // Predicated region
    $region6: #{textmlp_forward.1} parent=1 // pred_check
      _
    $region7: #{textmlp_forward.1} parent=1 // pred_check_branch
      %24 = sbr.rel (0) target = $region9
    $region8: #{textmlp_forward.1} parent=1 // pred_region
      %s26 = ssub.s32 8192, 8192
      %27 = vsyncadd [#allocation3], %s26
      %s28 = sshll.u32 [#allocation2], 4
      %s29 = int_to_ptr.vmem [resolvable:$true] %s28
      %34 = dma.hbm_to_vmem [thread:$0]  %s1, 8192, %s29, [#allocation3], 128, 128, 8
    $region9: #{textmlp_forward.1} parent=1 // pred_fallthru
      _
    // Predicated region
    $region10: #{textmlp_forward.1} parent=1 // pred_check
      _
    $region11: #{textmlp_forward.1} parent=1 // pred_check_branch
      %36 = sbr.rel (0) target = $region13
    $region12: #{textmlp_forward.1} parent=1 // pred_region
      _
    $region13: #{textmlp_forward.1} parent=1 // pred_fallthru
      _
    // Predicated region
    $region14: #{textmlp_forward.1} parent=1 // pred_check
      _
    $region15: #{textmlp_forward.1} parent=1 // pred_check_branch
      %38 = sbr.rel (0) target = $region17
    $region16: #{textmlp_forward.1} parent=1 // pred_region
      _
    $region17: #{textmlp_forward.1} parent=1 // pred_fallthru
      _
    // Predicated region
    $region18: #{textmlp_forward.1} parent=1 // pred_check
      _
    $region19: #{textmlp_forward.1} parent=1 // pred_check_branch
      %40 = sbr.rel (0) target = $region21
    $region20: #{textmlp_forward.1} parent=1 // pred_region
      _
    $region21: #{textmlp_forward.1} parent=1 // pred_fallthru
      _
    // Predicated region
    $region22: #{textmlp_forward.1} parent=1 // pred_check
      _
    $region23: #{textmlp_forward.1} parent=1 // pred_check_branch
      %42 = sbr.rel (0) target = $region25
    $region24: #{textmlp_forward.1} parent=1 // pred_region
      _
    $region25: #{textmlp_forward.1} parent=1 // pred_fallthru
      _
    // Predicated region
    $region26: #{textmlp_forward.1} parent=1 // pred_check
      _
    $region27: #{textmlp_forward.1} parent=1 // pred_check_branch
      %44 = sbr.rel (0) target = $region29
    $region28: #{textmlp_forward.1} parent=1 // pred_region
      _
    $region29: #{textmlp_forward.1} parent=1 // pred_fallthru
      _
    // Predicated region
    $region30: #{textmlp_forward.1} parent=1 // pred_check
      _
    $region31: #{textmlp_forward.1} parent=1 // pred_check_branch
      %46 = sbr.rel (0) target = $region33
    $region32: #{textmlp_forward.1} parent=1 // pred_region
      _
    $region33: #{textmlp_forward.1} parent=1 // pred_fallthru
      _
    // Predicated region
    $region34: #{textmlp_forward.1} parent=1 // pred_check
      _
    $region35: #{textmlp_forward.1} parent=1 // pred_check_branch
      %48 = sbr.rel (0) target = $region37
    $region36: #{textmlp_forward.1} parent=1 // pred_region
      _
    $region37: #{textmlp_forward.1} parent=1 // pred_fallthru
      _
    // Predicated region
    $region38: #{textmlp_forward.1} parent=1 // pred_check
      _
    $region39: #{textmlp_forward.1} parent=1 // pred_check_branch
      %50 = sbr.rel (0) target = $region41
    $region40: #{textmlp_forward.1} parent=1 // pred_region
      _
    $region41: #{textmlp_forward.1} parent=1 // pred_fallthru
      _
    // Predicated region
    $region42: #{textmlp_forward.1} parent=1 // pred_check
      _
    $region43: #{textmlp_forward.1} parent=1 // pred_check_branch
      %52 = sbr.rel (0) target = $region45
    $region44: #{textmlp_forward.1} parent=1 // pred_region
      _
    $region45: #{textmlp_forward.1} parent=1 // pred_fallthru
      _
    // Predicated region
    $region46: #{textmlp_forward.1} parent=1 // pred_check
      _
    $region47: #{textmlp_forward.1} parent=1 // pred_check_branch
      %54 = sbr.rel (0) target = $region49
    $region48: #{textmlp_forward.1} parent=1 // pred_region
      _
    $region49: #{textmlp_forward.1} parent=1 // pred_fallthru
      _
    // Predicated region
    $region50: #{textmlp_forward.1} parent=1 // pred_check
      _
    $region51: #{textmlp_forward.1} parent=1 // pred_check_branch
      %56 = sbr.rel (0) target = $region53
    $region52: #{textmlp_forward.1} parent=1 // pred_region
      _
    $region53: #{textmlp_forward.1} parent=1 // pred_fallthru
      _
    // Predicated region
    $region54: #{textmlp_forward.1} parent=1 // pred_check
      _
    $region55: #{textmlp_forward.1} parent=1 // pred_check_branch
      %58 = sbr.rel (0) target = $region57
    $region56: #{textmlp_forward.1} parent=1 // pred_region
      _
    $region57: #{textmlp_forward.1} parent=1 // pred_fallthru
      _
    // Predicated region
    $region58: #{textmlp_forward.1} parent=1 // pred_check
      _
    $region59: #{textmlp_forward.1} parent=1 // pred_check_branch
      %60 = sbr.rel (0) target = $region61
    $region60: #{textmlp_forward.1} parent=1 // pred_region
      _
    $region61: #{textmlp_forward.1} parent=1 // pred_fallthru
      _
    // Predicated region
    $region62: #{textmlp_forward.1} parent=1 // pred_check
      _
    $region63: #{textmlp_forward.1} parent=1 // pred_check_branch
      %62 = sbr.rel (0) target = $region65
    $region64: #{textmlp_forward.1} parent=1 // pred_region
      %63 = dma.done [#allocation3], 8192
    $region65: #{textmlp_forward.1} parent=1 // pred_fallthru
      _
    %v64 = vld [vmem:[%s0] sm:$0xff]
    %v65 = vld [vmem:[%s0 + $0x8] sm:$0xff]
    %v66 = vld [vmem:[%s0 + $0x10] sm:$0xff]
    %v67 = vld [vmem:[%s0 + $0x18] sm:$0xff]
    %v68 = vld [vmem:[#allocation2] sm:$0xff]
    %v69 = vld [vmem:[#allocation2 + $0x8] sm:$0xff]
    %v70 = vld [vmem:[#allocation2 + $0x10] sm:$0xff]
    %v71 = vld [vmem:[#allocation2 + $0x18] sm:$0xff]
    %v72 = vld [vmem:[#allocation2 + $0x20] sm:$0xff]
    %v73 = vld [vmem:[#allocation2 + $0x28] sm:$0xff]
    %v74 = vld [vmem:[#allocation2 + $0x30] sm:$0xff]
    %v75 = vld [vmem:[#allocation2 + $0x38] sm:$0xff]
    %v76 = vld [vmem:[#allocation2 + $0x40] sm:$0xff]
    %v77 = vld [vmem:[#allocation2 + $0x48] sm:$0xff]
    %v78 = vld [vmem:[#allocation2 + $0x50] sm:$0xff]
    %v79 = vld [vmem:[#allocation2 + $0x58] sm:$0xff]
    %v80 = vld [vmem:[#allocation2 + $0x60] sm:$0xff]
    %v81 = vld [vmem:[#allocation2 + $0x68] sm:$0xff]
    %v82 = vld [vmem:[#allocation2 + $0x70] sm:$0xff]
    %v83 = vld [vmem:[#allocation2 + $0x78] sm:$0xff]
    %v84 = vld [vmem:[#allocation2 + $0x80] sm:$0xff]
    %v85 = vld [vmem:[#allocation2 + $0x88] sm:$0xff]
    %v86 = vld [vmem:[#allocation2 + $0x90] sm:$0xff]
    %v87 = vld [vmem:[#allocation2 + $0x98] sm:$0xff]
    %v88 = vld [vmem:[#allocation2 + $0xa0] sm:$0xff]
    %v89 = vld [vmem:[#allocation2 + $0xa8] sm:$0xff]
    %v90 = vld [vmem:[#allocation2 + $0xb0] sm:$0xff]
    %v91 = vld [vmem:[#allocation2 + $0xb8] sm:$0xff]
    %v92 = vld [vmem:[#allocation2 + $0xc0] sm:$0xff]
    %v93 = vld [vmem:[#allocation2 + $0xc8] sm:$0xff]
    %v94 = vld [vmem:[#allocation2 + $0xd0] sm:$0xff]
    %v95 = vld [vmem:[#allocation2 + $0xd8] sm:$0xff]
    %v96 = vld [vmem:[#allocation2 + $0xe0] sm:$0xff]
    %v97 = vld [vmem:[#allocation2 + $0xe8] sm:$0xff]
    %v98 = vld [vmem:[#allocation2 + $0xf0] sm:$0xff]
    %v99 = vld [vmem:[#allocation2 + $0xf8] sm:$0xff]
    %v100 = vld [vmem:[#allocation2 + $0x100] sm:$0xff]
    %v101 = vld [vmem:[#allocation2 + $0x108] sm:$0xff]
    %v102 = vld [vmem:[#allocation2 + $0x110] sm:$0xff]
    %v103 = vld [vmem:[#allocation2 + $0x118] sm:$0xff]
    %v104 = vld [vmem:[#allocation2 + $0x120] sm:$0xff]
    %v105 = vld [vmem:[#allocation2 + $0x128] sm:$0xff]
    %v106 = vld [vmem:[#allocation2 + $0x130] sm:$0xff]
    %v107 = vld [vmem:[#allocation2 + $0x138] sm:$0xff]
    %v108 = vld [vmem:[#allocation2 + $0x140] sm:$0xff]
    %v109 = vld [vmem:[#allocation2 + $0x148] sm:$0xff]
    %v110 = vld [vmem:[#allocation2 + $0x150] sm:$0xff]
    %v111 = vld [vmem:[#allocation2 + $0x158] sm:$0xff]
    %v112 = vld [vmem:[#allocation2 + $0x160] sm:$0xff]
    %v113 = vld [vmem:[#allocation2 + $0x168] sm:$0xff]
    %v114 = vld [vmem:[#allocation2 + $0x170] sm:$0xff]
    %v115 = vld [vmem:[#allocation2 + $0x178] sm:$0xff]
    %v116 = vld [vmem:[#allocation2 + $0x180] sm:$0xff]
    %v117 = vld [vmem:[#allocation2 + $0x188] sm:$0xff]
    %v118 = vld [vmem:[#allocation2 + $0x190] sm:$0xff]
    %v119 = vld [vmem:[#allocation2 + $0x198] sm:$0xff]
    %v120 = vld [vmem:[#allocation2 + $0x1a0] sm:$0xff]
    %v121 = vld [vmem:[#allocation2 + $0x1a8] sm:$0xff]
    %v122 = vld [vmem:[#allocation2 + $0x1b0] sm:$0xff]
    %v123 = vld [vmem:[#allocation2 + $0x1b8] sm:$0xff]
    %v124 = vld [vmem:[#allocation2 + $0x1c0] sm:$0xff]
    %v125 = vld [vmem:[#allocation2 + $0x1c8] sm:$0xff]
    %v126 = vld [vmem:[#allocation2 + $0x1d0] sm:$0xff]
    %v127 = vld [vmem:[#allocation2 + $0x1d8] sm:$0xff]
    %v128 = vld [vmem:[#allocation2 + $0x1e0] sm:$0xff]
    %v129 = vld [vmem:[#allocation2 + $0x1e8] sm:$0xff]
    %v130 = vld [vmem:[#allocation2 + $0x1f0] sm:$0xff]
    %v131 = vld [vmem:[#allocation2 + $0x1f8] sm:$0xff]
    %v132 = vld [vmem:[%s2] sm:$0x1]
    %v134 = vlaneseq
    %v135 = vshrl.u32 %v134, 7
    %v136 = vsub.s32 0, %v135
    %v137 = vrot.slane %v132, %v136
    %139 = vmatprep.subr.mxu0 0.0
    %140 = vmatpush1.msra.mxu0 %v83
    %141 = vmatprep.subr.mxu0 0.0
    %142 = vmatpush1.msra.mxu0 %v82
    %143 = vmatprep.subr.mxu0 0.0
    %144 = vmatpush1.msra.mxu0 %v81
    %145 = vmatprep.subr.mxu0 0.0
    %146 = vmatpush1.msra.mxu0 %v80
    %147 = vmatprep.subr.mxu0 0.0
    %148 = vmatpush1.msra.mxu0 %v79
    %149 = vmatprep.subr.mxu0 0.0
    %150 = vmatpush1.msra.mxu0 %v78
    %151 = vmatprep.subr.mxu0 0.0
    %152 = vmatpush1.msra.mxu0 %v77
    %153 = vmatprep.subr.mxu0 0.0
    %154 = vmatpush1.msra.mxu0 %v76
    %155 = vmatprep.subr.mxu0 0.0
    %156 = vmatpush1.msra.mxu0 %v75
    %157 = vmatprep.subr.mxu0 0.0
    %158 = vmatpush1.msra.mxu0 %v74
    %159 = vmatprep.subr.mxu0 0.0
    %160 = vmatpush1.msra.mxu0 %v73
    %161 = vmatprep.subr.mxu0 0.0
    %162 = vmatpush1.msra.mxu0 %v72
    %163 = vmatprep.subr.mxu0 0.0
    %164 = vmatpush1.msra.mxu0 %v71
    %165 = vmatprep.subr.mxu0 0.0
    %166 = vmatpush1.msra.mxu0 %v70
    %167 = vmatprep.subr.mxu0 0.0
    %168 = vmatpush1.msra.mxu0 %v69
    %169 = vmatprep.subr.mxu0 0.0
    %170 = vmatpush1.msra.mxu0 %v68
    %171 = vmatprep.subr.mxu0 0.0
    %172 = vmatpush2.msra.mxu0 %v99
    %173 = vmatprep.subr.mxu0 0.0
    %174 = vmatpush2.msra.mxu0 %v98
    %175 = vmatprep.subr.mxu0 0.0
    %176 = vmatpush2.msra.mxu0 %v97
    %177 = vmatprep.subr.mxu0 0.0
    %178 = vmatpush2.msra.mxu0 %v96
    %179 = vmatprep.subr.mxu0 0.0
    %180 = vmatpush2.msra.mxu0 %v95
    %181 = vmatprep.subr.mxu0 0.0
    %182 = vmatpush2.msra.mxu0 %v94
    %183 = vmatprep.subr.mxu0 0.0
    %184 = vmatpush2.msra.mxu0 %v93
    %185 = vmatprep.subr.mxu0 0.0
    %186 = vmatpush2.msra.mxu0 %v92
    %187 = vmatprep.subr.mxu0 0.0
    %188 = vmatpush2.msra.mxu0 %v91
    %189 = vmatprep.subr.mxu0 0.0
    %190 = vmatpush2.msra.mxu0 %v90
    %191 = vmatprep.subr.mxu0 0.0
    %192 = vmatpush2.msra.mxu0 %v89
    %193 = vmatprep.subr.mxu0 0.0
    %194 = vmatpush2.msra.mxu0 %v88
    %195 = vmatprep.subr.mxu0 0.0
    %196 = vmatpush2.msra.mxu0 %v87
    %197 = vmatprep.subr.mxu0 0.0
    %198 = vmatpush2.msra.mxu0 %v86
    %199 = vmatprep.subr.mxu0 0.0
    %200 = vmatpush2.msra.mxu0 %v85
    %201 = vmatprep.subr.mxu0 0.0
    %202 = vmatpush2.msra.mxu0 %v84
    %203 = vmatprep.mubr.f32.mxu0 %v65
    %204 = vmatmul.mubr.f32.gmra.mxu0 %v64
    %v205 = vpop.f32.mrf.mxu0
    %v206 = vadd.f32 %v137, %v205
    %v207 = vpop.f32.mrf.mxu0
    %208 = vdwg.mxu0
    %209 = vmatprep.subr.mxu0 0.0
    %210 = vmatpush1.msra.mxu0 %v115
    %211 = vmatprep.subr.mxu0 0.0
    %212 = vmatpush1.msra.mxu0 %v114
    %213 = vmatprep.subr.mxu0 0.0
    %214 = vmatpush1.msra.mxu0 %v113
    %215 = vmatprep.subr.mxu0 0.0
    %216 = vmatpush1.msra.mxu0 %v112
    %217 = vmatprep.subr.mxu0 0.0
    %218 = vmatpush1.msra.mxu0 %v111
    %219 = vmatprep.subr.mxu0 0.0
    %220 = vmatpush1.msra.mxu0 %v110
    %221 = vmatprep.subr.mxu0 0.0
    %222 = vmatpush1.msra.mxu0 %v109
    %223 = vmatprep.subr.mxu0 0.0
    %224 = vmatpush1.msra.mxu0 %v108
    %225 = vmatprep.subr.mxu0 0.0
    %226 = vmatpush1.msra.mxu0 %v107
    %227 = vmatprep.subr.mxu0 0.0
    %228 = vmatpush1.msra.mxu0 %v106
    %229 = vmatprep.subr.mxu0 0.0
    %230 = vmatpush1.msra.mxu0 %v105
    %231 = vmatprep.subr.mxu0 0.0
    %232 = vmatpush1.msra.mxu0 %v104
    %233 = vmatprep.subr.mxu0 0.0
    %234 = vmatpush1.msra.mxu0 %v103
    %235 = vmatprep.subr.mxu0 0.0
    %236 = vmatpush1.msra.mxu0 %v102
    %237 = vmatprep.subr.mxu0 0.0
    %238 = vmatpush1.msra.mxu0 %v101
    %239 = vmatprep.subr.mxu0 0.0
    %240 = vmatpush1.msra.mxu0 %v100
    %241 = vmatprep.subr.mxu0 0.0
    %242 = vmatpush2.msra.mxu0 %v131
    %243 = vmatprep.subr.mxu0 0.0
    %244 = vmatpush2.msra.mxu0 %v130
    %245 = vmatprep.subr.mxu0 0.0
    %246 = vmatpush2.msra.mxu0 %v129
    %247 = vmatprep.subr.mxu0 0.0
    %248 = vmatpush2.msra.mxu0 %v128
    %249 = vmatprep.subr.mxu0 0.0
    %250 = vmatpush2.msra.mxu0 %v127
    %251 = vmatprep.subr.mxu0 0.0
    %252 = vmatpush2.msra.mxu0 %v126
    %253 = vmatprep.subr.mxu0 0.0
    %254 = vmatpush2.msra.mxu0 %v125
    %255 = vmatprep.subr.mxu0 0.0
    %256 = vmatpush2.msra.mxu0 %v124
    %257 = vmatprep.subr.mxu0 0.0
    %258 = vmatpush2.msra.mxu0 %v123
    %259 = vmatprep.subr.mxu0 0.0
    %260 = vmatpush2.msra.mxu0 %v122
    %261 = vmatprep.subr.mxu0 0.0
    %262 = vmatpush2.msra.mxu0 %v121
    %263 = vmatprep.subr.mxu0 0.0
    %264 = vmatpush2.msra.mxu0 %v120
    %265 = vmatprep.subr.mxu0 0.0
    %266 = vmatpush2.msra.mxu0 %v119
    %267 = vmatprep.subr.mxu0 0.0
    %268 = vmatpush2.msra.mxu0 %v118
    %269 = vmatprep.subr.mxu0 0.0
    %270 = vmatpush2.msra.mxu0 %v117
    %271 = vmatprep.subr.mxu0 0.0
    %272 = vmatpush2.msra.mxu0 %v116
    %273 = vmatprep.mubr.f32.mxu0 %v67
    %274 = vmatmul.mubr.f32.gmra.mxu0 %v66
    %v275 = vpop.f32.mrf.mxu0
    %v276 = vadd.f32 %v206, %v275
    %v277 = vpop.f32.mrf.mxu0
    %278 = vdwg.mxu0
    %v279 = vld [vmem:[%s3] sm:$0x1]
    %v280 = vld [vmem:[%s4] sm:$0x1]
    %v281 = vrot.slane %v276, 4
    %v282 = vadd.f32 %v276, %v281
    %v283 = vrot.slane %v282, 2
    %v284 = vadd.f32 %v282, %v283
    %v285 = vrot.slane %v284, 1
    %v286 = vadd.f32 %v284, %v285
    %v287 = vrcp.pop 8.0
    %v288 = vmul.f32 %v286, %v287
    %v289 = vsub.f32 %v276, %v288
    %v290 = vmul.f32 %v289, %v289
    %v291 = vrot.slane %v290, 4
    %v292 = vadd.f32 %v290, %v291
    %v293 = vrot.slane %v292, 2
    %v294 = vadd.f32 %v292, %v293
    %v295 = vrot.slane %v294, 1
    %v296 = vadd.f32 %v294, %v295
    %v297 = vmul.f32 %v296, %v287
    %v298 = vadd.f32 %v297, 1e-05
    %v299 = vrsqrt.pop %v298
    %v300 = vmul.f32 %v289, %v299
    %v302 = vlaneseq
    %v303 = vshrl.u32 %v302, 7
    %v304 = vsub.s32 0, %v303
    %v305 = vrot.slane %v279, %v304
    %v307 = vmul.f32 %v300, %v305
    %v309 = vlaneseq
    %v310 = vshrl.u32 %v309, 7
    %v311 = vsub.s32 0, %v310
    %v312 = vrot.slane %v280, %v311
    %v314 = vadd.f32 %v307, %v312
    %v315 = vmax.f32 %v314, 0.0
    %v316 = vld [vmem:[%s5] sm:$0xff]
    %v317 = vld [vmem:[%s5 + $0x8] sm:$0xff]
    %v318 = vld [vmem:[%s5 + $0x10] sm:$0xff]
    %v319 = vld [vmem:[%s5 + $0x18] sm:$0xff]
    %v320 = vld [vmem:[%s5 + $0x20] sm:$0xff]
    %v321 = vld [vmem:[%s5 + $0x28] sm:$0xff]
    %v322 = vld [vmem:[%s5 + $0x30] sm:$0xff]
    %v323 = vld [vmem:[%s5 + $0x38] sm:$0xff]
    %v324 = vld [vmem:[%s5 + $0x40] sm:$0xff]
    %v325 = vld [vmem:[%s5 + $0x48] sm:$0xff]
    %v326 = vld [vmem:[%s5 + $0x50] sm:$0xff]
    %v327 = vld [vmem:[%s5 + $0x58] sm:$0xff]
    %v328 = vld [vmem:[%s5 + $0x60] sm:$0xff]
    %v329 = vld [vmem:[%s5 + $0x68] sm:$0xff]
    %v330 = vld [vmem:[%s5 + $0x70] sm:$0xff]
    %v331 = vld [vmem:[%s5 + $0x78] sm:$0xff]
    %v332 = vld [vmem:[%s6] sm:$0x1]
    %v334 = vlaneseq
    %v335 = vshrl.u32 %v334, 7
    %v336 = vsub.s32 0, %v335
    %v337 = vrot.slane %v332, %v336
    %339 = vmatprep.subr.mxu0 0.0
    %340 = vmatpush1.msra.mxu0 %v331
    %341 = vmatprep.subr.mxu0 0.0
    %342 = vmatpush1.msra.mxu0 %v330
    %343 = vmatprep.subr.mxu0 0.0
    %344 = vmatpush1.msra.mxu0 %v329
    %345 = vmatprep.subr.mxu0 0.0
    %346 = vmatpush1.msra.mxu0 %v328
    %347 = vmatprep.subr.mxu0 0.0
    %348 = vmatpush1.msra.mxu0 %v327
    %349 = vmatprep.subr.mxu0 0.0
    %350 = vmatpush1.msra.mxu0 %v326
    %351 = vmatprep.subr.mxu0 0.0
    %352 = vmatpush1.msra.mxu0 %v325
    %353 = vmatprep.subr.mxu0 0.0
    %354 = vmatpush1.msra.mxu0 %v324
    %355 = vmatprep.subr.mxu0 0.0
    %356 = vmatpush1.msra.mxu0 %v323
    %357 = vmatprep.subr.mxu0 0.0
    %358 = vmatpush1.msra.mxu0 %v322
    %359 = vmatprep.subr.mxu0 0.0
    %360 = vmatpush1.msra.mxu0 %v321
    %361 = vmatprep.subr.mxu0 0.0
    %362 = vmatpush1.msra.mxu0 %v320
    %363 = vmatprep.subr.mxu0 0.0
    %364 = vmatpush1.msra.mxu0 %v319
    %365 = vmatprep.subr.mxu0 0.0
    %366 = vmatpush1.msra.mxu0 %v318
    %367 = vmatprep.subr.mxu0 0.0
    %368 = vmatpush1.msra.mxu0 %v317
    %369 = vmatprep.subr.mxu0 0.0
    %370 = vmatpush1.msra.mxu0 %v316
    %371 = vmatprep.subr.mxu0 0.0
    %372 = vmatpush2.msra.mxu0 0.0
    %373 = vmatprep.subr.mxu0 0.0
    %374 = vmatpush2.msra.mxu0 0.0
    %375 = vmatprep.subr.mxu0 0.0
    %376 = vmatpush2.msra.mxu0 0.0
    %377 = vmatprep.subr.mxu0 0.0
    %378 = vmatpush2.msra.mxu0 0.0
    %379 = vmatprep.subr.mxu0 0.0
    %380 = vmatpush2.msra.mxu0 0.0
    %381 = vmatprep.subr.mxu0 0.0
    %382 = vmatpush2.msra.mxu0 0.0
    %383 = vmatprep.subr.mxu0 0.0
    %384 = vmatpush2.msra.mxu0 0.0
    %385 = vmatprep.subr.mxu0 0.0
    %386 = vmatpush2.msra.mxu0 0.0
    %387 = vmatprep.subr.mxu0 0.0
    %388 = vmatpush2.msra.mxu0 0.0
    %389 = vmatprep.subr.mxu0 0.0
    %390 = vmatpush2.msra.mxu0 0.0
    %391 = vmatprep.subr.mxu0 0.0
    %392 = vmatpush2.msra.mxu0 0.0
    %393 = vmatprep.subr.mxu0 0.0
    %394 = vmatpush2.msra.mxu0 0.0
    %395 = vmatprep.subr.mxu0 0.0
    %396 = vmatpush2.msra.mxu0 0.0
    %397 = vmatprep.subr.mxu0 0.0
    %398 = vmatpush2.msra.mxu0 0.0
    %399 = vmatprep.subr.mxu0 0.0
    %400 = vmatpush2.msra.mxu0 0.0
    %401 = vmatprep.subr.mxu0 0.0
    %402 = vmatpush2.msra.mxu0 0.0
    %403 = vmatprep.mubr.f32.mxu0 0.0
    %404 = vmatmul.mubr.f32.gmra.mxu0 %v315
    %v405 = vpop.f32.mrf.mxu0
    %v406 = vadd.f32 %v337, %v405
    %v407 = vpop.f32.mrf.mxu0
    %408 = vdwg.mxu0
    %v409 = vld [vmem:[%s7] sm:$0x1]
    %v410 = vld [vmem:[%s8] sm:$0x1]
    %v411 = vrot.slane %v406, 4
    %v412 = vadd.f32 %v406, %v411
    %v413 = vrot.slane %v412, 2
    %v414 = vadd.f32 %v412, %v413
    %v415 = vrot.slane %v414, 1
    %v416 = vadd.f32 %v414, %v415
    %v417 = vmul.f32 %v416, %v287
    %v418 = vsub.f32 %v406, %v417
    %v419 = vmul.f32 %v418, %v418
    %v420 = vrot.slane %v419, 4
    %v421 = vadd.f32 %v419, %v420
    %v422 = vrot.slane %v421, 2
    %v423 = vadd.f32 %v421, %v422
    %v424 = vrot.slane %v423, 1
    %v425 = vadd.f32 %v423, %v424
    %v426 = vmul.f32 %v425, %v287
    %v427 = vadd.f32 %v426, 1e-05
    %v428 = vrsqrt.pop %v427
    %v429 = vmul.f32 %v418, %v428
    %v431 = vlaneseq
    %v432 = vshrl.u32 %v431, 7
    %v433 = vsub.s32 0, %v432
    %v434 = vrot.slane %v409, %v433
    %v436 = vmul.f32 %v429, %v434
    %v438 = vlaneseq
    %v439 = vshrl.u32 %v438, 7
    %v440 = vsub.s32 0, %v439
    %v441 = vrot.slane %v410, %v440
    %v443 = vadd.f32 %v436, %v441
    %v444 = vmax.f32 %v443, 0.0
    %v445 = vld [vmem:[%s9] sm:$0xff]
    %v446 = vld [vmem:[%s9 + $0x8] sm:$0xff]
    %v447 = vld [vmem:[%s9 + $0x10] sm:$0xff]
    %v448 = vld [vmem:[%s9 + $0x18] sm:$0xff]
    %v449 = vld [vmem:[%s9 + $0x20] sm:$0xff]
    %v450 = vld [vmem:[%s9 + $0x28] sm:$0xff]
    %v451 = vld [vmem:[%s9 + $0x30] sm:$0xff]
    %v452 = vld [vmem:[%s9 + $0x38] sm:$0xff]
    %v453 = vld [vmem:[%s9 + $0x40] sm:$0xff]
    %v454 = vld [vmem:[%s9 + $0x48] sm:$0xff]
    %v455 = vld [vmem:[%s9 + $0x50] sm:$0xff]
    %v456 = vld [vmem:[%s9 + $0x58] sm:$0xff]
    %v457 = vld [vmem:[%s9 + $0x60] sm:$0xff]
    %v458 = vld [vmem:[%s9 + $0x68] sm:$0xff]
    %v459 = vld [vmem:[%s9 + $0x70] sm:$0xff]
    %v460 = vld [vmem:[%s9 + $0x78] sm:$0xff]
    %v461 = vld [vmem:[%s10] sm:$0x1]
    %v463 = vlaneseq
    %v464 = vshrl.u32 %v463, 7
    %v465 = vsub.s32 0, %v464
    %v466 = vrot.slane %v461, %v465
    %468 = vmatprep.subr.mxu0 0.0
    %469 = vmatpush1.msra.mxu0 %v460
    %470 = vmatprep.subr.mxu0 0.0
    %471 = vmatpush1.msra.mxu0 %v459
    %472 = vmatprep.subr.mxu0 0.0
    %473 = vmatpush1.msra.mxu0 %v458
    %474 = vmatprep.subr.mxu0 0.0
    %475 = vmatpush1.msra.mxu0 %v457
    %476 = vmatprep.subr.mxu0 0.0
    %477 = vmatpush1.msra.mxu0 %v456
    %478 = vmatprep.subr.mxu0 0.0
    %479 = vmatpush1.msra.mxu0 %v455
    %480 = vmatprep.subr.mxu0 0.0
    %481 = vmatpush1.msra.mxu0 %v454
    %482 = vmatprep.subr.mxu0 0.0
    %483 = vmatpush1.msra.mxu0 %v453
    %484 = vmatprep.subr.mxu0 0.0
    %485 = vmatpush1.msra.mxu0 %v452
    %486 = vmatprep.subr.mxu0 0.0
    %487 = vmatpush1.msra.mxu0 %v451
    %488 = vmatprep.subr.mxu0 0.0
    %489 = vmatpush1.msra.mxu0 %v450
    %490 = vmatprep.subr.mxu0 0.0
    %491 = vmatpush1.msra.mxu0 %v449
    %492 = vmatprep.subr.mxu0 0.0
    %493 = vmatpush1.msra.mxu0 %v448
    %494 = vmatprep.subr.mxu0 0.0
    %495 = vmatpush1.msra.mxu0 %v447
    %496 = vmatprep.subr.mxu0 0.0
    %497 = vmatpush1.msra.mxu0 %v446
    %498 = vmatprep.subr.mxu0 0.0
    %499 = vmatpush1.msra.mxu0 %v445
    %500 = vmatprep.subr.mxu0 0.0
    %501 = vmatpush2.msra.mxu0 0.0
    %502 = vmatprep.subr.mxu0 0.0
    %503 = vmatpush2.msra.mxu0 0.0
    %504 = vmatprep.subr.mxu0 0.0
    %505 = vmatpush2.msra.mxu0 0.0
    %506 = vmatprep.subr.mxu0 0.0
    %507 = vmatpush2.msra.mxu0 0.0
    %508 = vmatprep.subr.mxu0 0.0
    %509 = vmatpush2.msra.mxu0 0.0
    %510 = vmatprep.subr.mxu0 0.0
    %511 = vmatpush2.msra.mxu0 0.0
    %512 = vmatprep.subr.mxu0 0.0
    %513 = vmatpush2.msra.mxu0 0.0
    %514 = vmatprep.subr.mxu0 0.0
    %515 = vmatpush2.msra.mxu0 0.0
    %516 = vmatprep.subr.mxu0 0.0
    %517 = vmatpush2.msra.mxu0 0.0
    %518 = vmatprep.subr.mxu0 0.0
    %519 = vmatpush2.msra.mxu0 0.0
    %520 = vmatprep.subr.mxu0 0.0
    %521 = vmatpush2.msra.mxu0 0.0
    %522 = vmatprep.subr.mxu0 0.0
    %523 = vmatpush2.msra.mxu0 0.0
    %524 = vmatprep.subr.mxu0 0.0
    %525 = vmatpush2.msra.mxu0 0.0
    %526 = vmatprep.subr.mxu0 0.0
    %527 = vmatpush2.msra.mxu0 0.0
    %528 = vmatprep.subr.mxu0 0.0
    %529 = vmatpush2.msra.mxu0 0.0
    %530 = vmatprep.subr.mxu0 0.0
    %531 = vmatpush2.msra.mxu0 0.0
    %532 = vmatprep.mubr.f32.mxu0 0.0
    %533 = vmatmul.mubr.f32.gmra.mxu0 %v444
    %v534 = vpop.f32.mrf.mxu0
    %v535 = vadd.f32 %v466, %v534
    %v536 = vpop.f32.mrf.mxu0
    %537 = vdwg.mxu0
    %s538 = scalar_lea.vmem %s9, 128
    %v539 = vld [vmem:[%s538] sm:$0xff]
    %v540 = vld [vmem:[%s538 + $0x8] sm:$0xff]
    %v541 = vld [vmem:[%s538 + $0x10] sm:$0xff]
    %v542 = vld [vmem:[%s538 + $0x18] sm:$0xff]
    %v543 = vld [vmem:[%s538 + $0x20] sm:$0xff]
    %v544 = vld [vmem:[%s538 + $0x28] sm:$0xff]
    %v545 = vld [vmem:[%s538 + $0x30] sm:$0xff]
    %v546 = vld [vmem:[%s538 + $0x38] sm:$0xff]
    %v547 = vld [vmem:[%s538 + $0x40] sm:$0xff]
    %v548 = vld [vmem:[%s538 + $0x48] sm:$0xff]
    %v549 = vld [vmem:[%s538 + $0x50] sm:$0xff]
    %v550 = vld [vmem:[%s538 + $0x58] sm:$0xff]
    %v551 = vld [vmem:[%s538 + $0x60] sm:$0xff]
    %v552 = vld [vmem:[%s538 + $0x68] sm:$0xff]
    %v553 = vld [vmem:[%s538 + $0x70] sm:$0xff]
    %v554 = vld [vmem:[%s538 + $0x78] sm:$0xff]
    %s555 = scalar_lea.vmem %s10, 1
    %v556 = vld [vmem:[%s555] sm:$0x1]
    %v558 = vlaneseq
    %v559 = vshrl.u32 %v558, 7
    %v560 = vsub.s32 0, %v559
    %v561 = vrot.slane %v556, %v560
    %563 = vmatprep.subr.mxu0 0.0
    %564 = vmatpush1.msra.mxu0 %v554
    %565 = vmatprep.subr.mxu0 0.0
    %566 = vmatpush1.msra.mxu0 %v553
    %567 = vmatprep.subr.mxu0 0.0
    %568 = vmatpush1.msra.mxu0 %v552
    %569 = vmatprep.subr.mxu0 0.0
    %570 = vmatpush1.msra.mxu0 %v551
    %571 = vmatprep.subr.mxu0 0.0
    %572 = vmatpush1.msra.mxu0 %v550
    %573 = vmatprep.subr.mxu0 0.0
    %574 = vmatpush1.msra.mxu0 %v549
    %575 = vmatprep.subr.mxu0 0.0
    %576 = vmatpush1.msra.mxu0 %v548
    %577 = vmatprep.subr.mxu0 0.0
    %578 = vmatpush1.msra.mxu0 %v547
    %579 = vmatprep.subr.mxu0 0.0
    %580 = vmatpush1.msra.mxu0 %v546
    %581 = vmatprep.subr.mxu0 0.0
    %582 = vmatpush1.msra.mxu0 %v545
    %583 = vmatprep.subr.mxu0 0.0
    %584 = vmatpush1.msra.mxu0 %v544
    %585 = vmatprep.subr.mxu0 0.0
    %586 = vmatpush1.msra.mxu0 %v543
    %587 = vmatprep.subr.mxu0 0.0
    %588 = vmatpush1.msra.mxu0 %v542
    %589 = vmatprep.subr.mxu0 0.0
    %590 = vmatpush1.msra.mxu0 %v541
    %591 = vmatprep.subr.mxu0 0.0
    %592 = vmatpush1.msra.mxu0 %v540
    %593 = vmatprep.subr.mxu0 0.0
    %594 = vmatpush1.msra.mxu0 %v539
    %595 = vmatprep.subr.mxu0 0.0
    %596 = vmatpush2.msra.mxu0 0.0
    %597 = vmatprep.subr.mxu0 0.0
    %598 = vmatpush2.msra.mxu0 0.0
    %599 = vmatprep.subr.mxu0 0.0
    %600 = vmatpush2.msra.mxu0 0.0
    %601 = vmatprep.subr.mxu0 0.0
    %602 = vmatpush2.msra.mxu0 0.0
    %603 = vmatprep.subr.mxu0 0.0
    %604 = vmatpush2.msra.mxu0 0.0
    %605 = vmatprep.subr.mxu0 0.0
    %606 = vmatpush2.msra.mxu0 0.0
    %607 = vmatprep.subr.mxu0 0.0
    %608 = vmatpush2.msra.mxu0 0.0
    %609 = vmatprep.subr.mxu0 0.0
    %610 = vmatpush2.msra.mxu0 0.0
    %611 = vmatprep.subr.mxu0 0.0
    %612 = vmatpush2.msra.mxu0 0.0
    %613 = vmatprep.subr.mxu0 0.0
    %614 = vmatpush2.msra.mxu0 0.0
    %615 = vmatprep.subr.mxu0 0.0
    %616 = vmatpush2.msra.mxu0 0.0
    %617 = vmatprep.subr.mxu0 0.0
    %618 = vmatpush2.msra.mxu0 0.0
    %619 = vmatprep.subr.mxu0 0.0
    %620 = vmatpush2.msra.mxu0 0.0
    %621 = vmatprep.subr.mxu0 0.0
    %622 = vmatpush2.msra.mxu0 0.0
    %623 = vmatprep.subr.mxu0 0.0
    %624 = vmatpush2.msra.mxu0 0.0
    %625 = vmatprep.subr.mxu0 0.0
    %626 = vmatpush2.msra.mxu0 0.0
    %627 = vmatprep.mubr.f32.mxu0 0.0
    %628 = vmatmul.mubr.f32.gmra.mxu0 %v535
    %v629 = vpop.f32.mrf.mxu0
    %v630 = vadd.f32 %v561, %v629
    %v631 = vpop.f32.mrf.mxu0
    %632 = vdwg.mxu0
    %s633 = scalar_lea.vmem %s9, 256
    %v634 = vld [vmem:[%s633] sm:$0xff]
    %v635 = vld [vmem:[%s633 + $0x8] sm:$0xff]
    %v636 = vld [vmem:[%s633 + $0x10] sm:$0xff]
    %v637 = vld [vmem:[%s633 + $0x18] sm:$0xff]
    %v638 = vld [vmem:[%s633 + $0x20] sm:$0xff]
    %v639 = vld [vmem:[%s633 + $0x28] sm:$0xff]
    %v640 = vld [vmem:[%s633 + $0x30] sm:$0xff]
    %v641 = vld [vmem:[%s633 + $0x38] sm:$0xff]
    %v642 = vld [vmem:[%s633 + $0x40] sm:$0xff]
    %v643 = vld [vmem:[%s633 + $0x48] sm:$0xff]
    %v644 = vld [vmem:[%s633 + $0x50] sm:$0xff]
    %v645 = vld [vmem:[%s633 + $0x58] sm:$0xff]
    %v646 = vld [vmem:[%s633 + $0x60] sm:$0xff]
    %v647 = vld [vmem:[%s633 + $0x68] sm:$0xff]
    %v648 = vld [vmem:[%s633 + $0x70] sm:$0xff]
    %v649 = vld [vmem:[%s633 + $0x78] sm:$0xff]
    %s650 = scalar_lea.vmem %s10, 2
    %v651 = vld [vmem:[%s650] sm:$0x1]
    %v653 = vlaneseq
    %v654 = vshrl.u32 %v653, 7
    %v655 = vsub.s32 0, %v654
    %v656 = vrot.slane %v651, %v655
    %658 = vmatprep.subr.mxu0 0.0
    %659 = vmatpush1.msra.mxu0 %v649
    %660 = vmatprep.subr.mxu0 0.0
    %661 = vmatpush1.msra.mxu0 %v648
    %662 = vmatprep.subr.mxu0 0.0
    %663 = vmatpush1.msra.mxu0 %v647
    %664 = vmatprep.subr.mxu0 0.0
    %665 = vmatpush1.msra.mxu0 %v646
    %666 = vmatprep.subr.mxu0 0.0
    %667 = vmatpush1.msra.mxu0 %v645
    %668 = vmatprep.subr.mxu0 0.0
    %669 = vmatpush1.msra.mxu0 %v644
    %670 = vmatprep.subr.mxu0 0.0
    %671 = vmatpush1.msra.mxu0 %v643
    %672 = vmatprep.subr.mxu0 0.0
    %673 = vmatpush1.msra.mxu0 %v642
    %674 = vmatprep.subr.mxu0 0.0
    %675 = vmatpush1.msra.mxu0 %v641
    %676 = vmatprep.subr.mxu0 0.0
    %677 = vmatpush1.msra.mxu0 %v640
    %678 = vmatprep.subr.mxu0 0.0
    %679 = vmatpush1.msra.mxu0 %v639
    %680 = vmatprep.subr.mxu0 0.0
    %681 = vmatpush1.msra.mxu0 %v638
    %682 = vmatprep.subr.mxu0 0.0
    %683 = vmatpush1.msra.mxu0 %v637
    %684 = vmatprep.subr.mxu0 0.0
    %685 = vmatpush1.msra.mxu0 %v636
    %686 = vmatprep.subr.mxu0 0.0
    %687 = vmatpush1.msra.mxu0 %v635
    %688 = vmatprep.subr.mxu0 0.0
    %689 = vmatpush1.msra.mxu0 %v634
    %690 = vmatprep.subr.mxu0 0.0
    %691 = vmatpush2.msra.mxu0 0.0
    %692 = vmatprep.subr.mxu0 0.0
    %693 = vmatpush2.msra.mxu0 0.0
    %694 = vmatprep.subr.mxu0 0.0
    %695 = vmatpush2.msra.mxu0 0.0
    %696 = vmatprep.subr.mxu0 0.0
    %697 = vmatpush2.msra.mxu0 0.0
    %698 = vmatprep.subr.mxu0 0.0
    %699 = vmatpush2.msra.mxu0 0.0
    %700 = vmatprep.subr.mxu0 0.0
    %701 = vmatpush2.msra.mxu0 0.0
    %702 = vmatprep.subr.mxu0 0.0
    %703 = vmatpush2.msra.mxu0 0.0
    %704 = vmatprep.subr.mxu0 0.0
    %705 = vmatpush2.msra.mxu0 0.0
    %706 = vmatprep.subr.mxu0 0.0
    %707 = vmatpush2.msra.mxu0 0.0
    %708 = vmatprep.subr.mxu0 0.0
    %709 = vmatpush2.msra.mxu0 0.0
    %710 = vmatprep.subr.mxu0 0.0
    %711 = vmatpush2.msra.mxu0 0.0
    %712 = vmatprep.subr.mxu0 0.0
    %713 = vmatpush2.msra.mxu0 0.0
    %714 = vmatprep.subr.mxu0 0.0
    %715 = vmatpush2.msra.mxu0 0.0
    %716 = vmatprep.subr.mxu0 0.0
    %717 = vmatpush2.msra.mxu0 0.0
    %718 = vmatprep.subr.mxu0 0.0
    %719 = vmatpush2.msra.mxu0 0.0
    %720 = vmatprep.subr.mxu0 0.0
    %721 = vmatpush2.msra.mxu0 0.0
    %722 = vmatprep.mubr.f32.mxu0 0.0
    %723 = vmatmul.mubr.f32.gmra.mxu0 %v630
    %v724 = vpop.f32.mrf.mxu0
    %v725 = vadd.f32 %v656, %v724
    %v726 = vpop.f32.mrf.mxu0
    %727 = vdwg.mxu0
    %s728 = scalar_lea.vmem %s9, 384
    %v729 = vld [vmem:[%s728] sm:$0xff]
    %v730 = vld [vmem:[%s728 + $0x8] sm:$0xff]
    %v731 = vld [vmem:[%s728 + $0x10] sm:$0xff]
    %v732 = vld [vmem:[%s728 + $0x18] sm:$0xff]
    %v733 = vld [vmem:[%s728 + $0x20] sm:$0xff]
    %v734 = vld [vmem:[%s728 + $0x28] sm:$0xff]
    %v735 = vld [vmem:[%s728 + $0x30] sm:$0xff]
    %v736 = vld [vmem:[%s728 + $0x38] sm:$0xff]
    %v737 = vld [vmem:[%s728 + $0x40] sm:$0xff]
    %v738 = vld [vmem:[%s728 + $0x48] sm:$0xff]
    %v739 = vld [vmem:[%s728 + $0x50] sm:$0xff]
    %v740 = vld [vmem:[%s728 + $0x58] sm:$0xff]
    %v741 = vld [vmem:[%s728 + $0x60] sm:$0xff]
    %v742 = vld [vmem:[%s728 + $0x68] sm:$0xff]
    %v743 = vld [vmem:[%s728 + $0x70] sm:$0xff]
    %v744 = vld [vmem:[%s728 + $0x78] sm:$0xff]
    %s745 = scalar_lea.vmem %s10, 3
    %v746 = vld [vmem:[%s745] sm:$0x1]
    %v748 = vlaneseq
    %v749 = vshrl.u32 %v748, 7
    %v750 = vsub.s32 0, %v749
    %v751 = vrot.slane %v746, %v750
    %753 = vmatprep.subr.mxu0 0.0
    %754 = vmatpush1.msra.mxu0 %v744
    %755 = vmatprep.subr.mxu0 0.0
    %756 = vmatpush1.msra.mxu0 %v743
    %757 = vmatprep.subr.mxu0 0.0
    %758 = vmatpush1.msra.mxu0 %v742
    %759 = vmatprep.subr.mxu0 0.0
    %760 = vmatpush1.msra.mxu0 %v741
    %761 = vmatprep.subr.mxu0 0.0
    %762 = vmatpush1.msra.mxu0 %v740
    %763 = vmatprep.subr.mxu0 0.0
    %764 = vmatpush1.msra.mxu0 %v739
    %765 = vmatprep.subr.mxu0 0.0
    %766 = vmatpush1.msra.mxu0 %v738
    %767 = vmatprep.subr.mxu0 0.0
    %768 = vmatpush1.msra.mxu0 %v737
    %769 = vmatprep.subr.mxu0 0.0
    %770 = vmatpush1.msra.mxu0 %v736
    %771 = vmatprep.subr.mxu0 0.0
    %772 = vmatpush1.msra.mxu0 %v735
    %773 = vmatprep.subr.mxu0 0.0
    %774 = vmatpush1.msra.mxu0 %v734
    %775 = vmatprep.subr.mxu0 0.0
    %776 = vmatpush1.msra.mxu0 %v733
    %777 = vmatprep.subr.mxu0 0.0
    %778 = vmatpush1.msra.mxu0 %v732
    %779 = vmatprep.subr.mxu0 0.0
    %780 = vmatpush1.msra.mxu0 %v731
    %781 = vmatprep.subr.mxu0 0.0
    %782 = vmatpush1.msra.mxu0 %v730
    %783 = vmatprep.subr.mxu0 0.0
    %784 = vmatpush1.msra.mxu0 %v729
    %785 = vmatprep.subr.mxu0 0.0
    %786 = vmatpush2.msra.mxu0 0.0
    %787 = vmatprep.subr.mxu0 0.0
    %788 = vmatpush2.msra.mxu0 0.0
    %789 = vmatprep.subr.mxu0 0.0
    %790 = vmatpush2.msra.mxu0 0.0
    %791 = vmatprep.subr.mxu0 0.0
    %792 = vmatpush2.msra.mxu0 0.0
    %793 = vmatprep.subr.mxu0 0.0
    %794 = vmatpush2.msra.mxu0 0.0
    %795 = vmatprep.subr.mxu0 0.0
    %796 = vmatpush2.msra.mxu0 0.0
    %797 = vmatprep.subr.mxu0 0.0
    %798 = vmatpush2.msra.mxu0 0.0
    %799 = vmatprep.subr.mxu0 0.0
    %800 = vmatpush2.msra.mxu0 0.0
    %801 = vmatprep.subr.mxu0 0.0
    %802 = vmatpush2.msra.mxu0 0.0
    %803 = vmatprep.subr.mxu0 0.0
    %804 = vmatpush2.msra.mxu0 0.0
    %805 = vmatprep.subr.mxu0 0.0
    %806 = vmatpush2.msra.mxu0 0.0
    %807 = vmatprep.subr.mxu0 0.0
    %808 = vmatpush2.msra.mxu0 0.0
    %809 = vmatprep.subr.mxu0 0.0
    %810 = vmatpush2.msra.mxu0 0.0
    %811 = vmatprep.subr.mxu0 0.0
    %812 = vmatpush2.msra.mxu0 0.0
    %813 = vmatprep.subr.mxu0 0.0
    %814 = vmatpush2.msra.mxu0 0.0
    %815 = vmatprep.subr.mxu0 0.0
    %816 = vmatpush2.msra.mxu0 0.0
    %817 = vmatprep.mubr.f32.mxu0 0.0
    %818 = vmatmul.mubr.f32.gmra.mxu0 %v725
    %v819 = vpop.f32.mrf.mxu0
    %v820 = vadd.f32 %v751, %v819
    %v821 = vpop.f32.mrf.mxu0
    %822 = vdwg.mxu0
    %s823 = scalar_lea.vmem %s9, 512
    %v824 = vld [vmem:[%s823] sm:$0xff]
    %v825 = vld [vmem:[%s823 + $0x8] sm:$0xff]
    %v826 = vld [vmem:[%s823 + $0x10] sm:$0xff]
    %v827 = vld [vmem:[%s823 + $0x18] sm:$0xff]
    %v828 = vld [vmem:[%s823 + $0x20] sm:$0xff]
    %v829 = vld [vmem:[%s823 + $0x28] sm:$0xff]
    %v830 = vld [vmem:[%s823 + $0x30] sm:$0xff]
    %v831 = vld [vmem:[%s823 + $0x38] sm:$0xff]
    %v832 = vld [vmem:[%s823 + $0x40] sm:$0xff]
    %v833 = vld [vmem:[%s823 + $0x48] sm:$0xff]
    %v834 = vld [vmem:[%s823 + $0x50] sm:$0xff]
    %v835 = vld [vmem:[%s823 + $0x58] sm:$0xff]
    %v836 = vld [vmem:[%s823 + $0x60] sm:$0xff]
    %v837 = vld [vmem:[%s823 + $0x68] sm:$0xff]
    %v838 = vld [vmem:[%s823 + $0x70] sm:$0xff]
    %v839 = vld [vmem:[%s823 + $0x78] sm:$0xff]
    %s840 = scalar_lea.vmem %s10, 4
    %v841 = vld [vmem:[%s840] sm:$0x1]
    %v843 = vlaneseq
    %v844 = vshrl.u32 %v843, 7
    %v845 = vsub.s32 0, %v844
    %v846 = vrot.slane %v841, %v845
    %848 = vmatprep.subr.mxu0 0.0
    %849 = vmatpush1.msra.mxu0 %v839
    %850 = vmatprep.subr.mxu0 0.0
    %851 = vmatpush1.msra.mxu0 %v838
    %852 = vmatprep.subr.mxu0 0.0
    %853 = vmatpush1.msra.mxu0 %v837
    %854 = vmatprep.subr.mxu0 0.0
    %855 = vmatpush1.msra.mxu0 %v836
    %856 = vmatprep.subr.mxu0 0.0
    %857 = vmatpush1.msra.mxu0 %v835
    %858 = vmatprep.subr.mxu0 0.0
    %859 = vmatpush1.msra.mxu0 %v834
    %860 = vmatprep.subr.mxu0 0.0
    %861 = vmatpush1.msra.mxu0 %v833
    %862 = vmatprep.subr.mxu0 0.0
    %863 = vmatpush1.msra.mxu0 %v832
    %864 = vmatprep.subr.mxu0 0.0
    %865 = vmatpush1.msra.mxu0 %v831
    %866 = vmatprep.subr.mxu0 0.0
    %867 = vmatpush1.msra.mxu0 %v830
    %868 = vmatprep.subr.mxu0 0.0
    %869 = vmatpush1.msra.mxu0 %v829
    %870 = vmatprep.subr.mxu0 0.0
    %871 = vmatpush1.msra.mxu0 %v828
    %872 = vmatprep.subr.mxu0 0.0
    %873 = vmatpush1.msra.mxu0 %v827
    %874 = vmatprep.subr.mxu0 0.0
    %875 = vmatpush1.msra.mxu0 %v826
    %876 = vmatprep.subr.mxu0 0.0
    %877 = vmatpush1.msra.mxu0 %v825
    %878 = vmatprep.subr.mxu0 0.0
    %879 = vmatpush1.msra.mxu0 %v824
    %880 = vmatprep.subr.mxu0 0.0
    %881 = vmatpush2.msra.mxu0 0.0
    %882 = vmatprep.subr.mxu0 0.0
    %883 = vmatpush2.msra.mxu0 0.0
    %884 = vmatprep.subr.mxu0 0.0
    %885 = vmatpush2.msra.mxu0 0.0
    %886 = vmatprep.subr.mxu0 0.0
    %887 = vmatpush2.msra.mxu0 0.0
    %888 = vmatprep.subr.mxu0 0.0
    %889 = vmatpush2.msra.mxu0 0.0
    %890 = vmatprep.subr.mxu0 0.0
    %891 = vmatpush2.msra.mxu0 0.0
    %892 = vmatprep.subr.mxu0 0.0
    %893 = vmatpush2.msra.mxu0 0.0
    %894 = vmatprep.subr.mxu0 0.0
    %895 = vmatpush2.msra.mxu0 0.0
    %896 = vmatprep.subr.mxu0 0.0
    %897 = vmatpush2.msra.mxu0 0.0
    %898 = vmatprep.subr.mxu0 0.0
    %899 = vmatpush2.msra.mxu0 0.0
    %900 = vmatprep.subr.mxu0 0.0
    %901 = vmatpush2.msra.mxu0 0.0
    %902 = vmatprep.subr.mxu0 0.0
    %903 = vmatpush2.msra.mxu0 0.0
    %904 = vmatprep.subr.mxu0 0.0
    %905 = vmatpush2.msra.mxu0 0.0
    %906 = vmatprep.subr.mxu0 0.0
    %907 = vmatpush2.msra.mxu0 0.0
    %908 = vmatprep.subr.mxu0 0.0
    %909 = vmatpush2.msra.mxu0 0.0
    %910 = vmatprep.subr.mxu0 0.0
    %911 = vmatpush2.msra.mxu0 0.0
    %912 = vmatprep.mubr.f32.mxu0 0.0
    %913 = vmatmul.mubr.f32.gmra.mxu0 %v820
    %v914 = vpop.f32.mrf.mxu0
    %v915 = vadd.f32 %v846, %v914
    %v916 = vpop.f32.mrf.mxu0
    %917 = vdwg.mxu0
    %v918 = vld [vmem:[%s11] sm:$0x1]
    %v919 = vld [vmem:[%s12] sm:$0x1]
    %v920 = vrot.slane %v915, 4
    %v921 = vadd.f32 %v915, %v920
    %v922 = vrot.slane %v921, 2
    %v923 = vadd.f32 %v921, %v922
    %v924 = vrot.slane %v923, 1
    %v925 = vadd.f32 %v923, %v924
    %v926 = vmul.f32 %v925, %v287
    %v927 = vsub.f32 %v915, %v926
    %v928 = vmul.f32 %v927, %v927
    %v929 = vrot.slane %v928, 4
    %v930 = vadd.f32 %v928, %v929
    %v931 = vrot.slane %v930, 2
    %v932 = vadd.f32 %v930, %v931
    %v933 = vrot.slane %v932, 1
    %v934 = vadd.f32 %v932, %v933
    %v935 = vmul.f32 %v934, %v287
    %v936 = vadd.f32 %v935, 1e-05
    %v937 = vrsqrt.pop %v936
    %v938 = vmul.f32 %v927, %v937
    %v940 = vlaneseq
    %v941 = vshrl.u32 %v940, 7
    %v942 = vsub.s32 0, %v941
    %v943 = vrot.slane %v918, %v942
    %v945 = vmul.f32 %v938, %v943
    %v947 = vlaneseq
    %v948 = vshrl.u32 %v947, 7
    %v949 = vsub.s32 0, %v948
    %v950 = vrot.slane %v919, %v949
    %v952 = vadd.f32 %v945, %v950
    %v953 = vmax.f32 %v952, 0.0
    %v954 = vld [vmem:[%s13] sm:$0xff]
    %v955 = vld [vmem:[%s13 + $0x8] sm:$0xff]
    %v956 = vld [vmem:[%s13 + $0x10] sm:$0xff]
    %v957 = vld [vmem:[%s13 + $0x18] sm:$0xff]
    %v958 = vld [vmem:[%s13 + $0x20] sm:$0xff]
    %v959 = vld [vmem:[%s13 + $0x28] sm:$0xff]
    %v960 = vld [vmem:[%s13 + $0x30] sm:$0xff]
    %v961 = vld [vmem:[%s13 + $0x38] sm:$0xff]
    %v962 = vld [vmem:[%s13 + $0x40] sm:$0xff]
    %v963 = vld [vmem:[%s13 + $0x48] sm:$0xff]
    %v964 = vld [vmem:[%s13 + $0x50] sm:$0xff]
    %v965 = vld [vmem:[%s13 + $0x58] sm:$0xff]
    %v966 = vld [vmem:[%s13 + $0x60] sm:$0xff]
    %v967 = vld [vmem:[%s13 + $0x68] sm:$0xff]
    %v968 = vld [vmem:[%s13 + $0x70] sm:$0xff]
    %v969 = vld [vmem:[%s13 + $0x78] sm:$0xff]
    %v970 = vld [vmem:[%s14] sm:$0x1]
    %v972 = vlaneseq
    %v973 = vshrl.u32 %v972, 7
    %v974 = vsub.s32 0, %v973
    %v975 = vrot.slane %v970, %v974
    %977 = vmatprep.subr.mxu0 0.0
    %978 = vmatpush1.msra.mxu0 %v969
    %979 = vmatprep.subr.mxu0 0.0
    %980 = vmatpush1.msra.mxu0 %v968
    %981 = vmatprep.subr.mxu0 0.0
    %982 = vmatpush1.msra.mxu0 %v967
    %983 = vmatprep.subr.mxu0 0.0
    %984 = vmatpush1.msra.mxu0 %v966
    %985 = vmatprep.subr.mxu0 0.0
    %986 = vmatpush1.msra.mxu0 %v965
    %987 = vmatprep.subr.mxu0 0.0
    %988 = vmatpush1.msra.mxu0 %v964
    %989 = vmatprep.subr.mxu0 0.0
    %990 = vmatpush1.msra.mxu0 %v963
    %991 = vmatprep.subr.mxu0 0.0
    %992 = vmatpush1.msra.mxu0 %v962
    %993 = vmatprep.subr.mxu0 0.0
    %994 = vmatpush1.msra.mxu0 %v961
    %995 = vmatprep.subr.mxu0 0.0
    %996 = vmatpush1.msra.mxu0 %v960
    %997 = vmatprep.subr.mxu0 0.0
    %998 = vmatpush1.msra.mxu0 %v959
    %999 = vmatprep.subr.mxu0 0.0
    %1000 = vmatpush1.msra.mxu0 %v958
    %1001 = vmatprep.subr.mxu0 0.0
    %1002 = vmatpush1.msra.mxu0 %v957
    %1003 = vmatprep.subr.mxu0 0.0
    %1004 = vmatpush1.msra.mxu0 %v956
    %1005 = vmatprep.subr.mxu0 0.0
    %1006 = vmatpush1.msra.mxu0 %v955
    %1007 = vmatprep.subr.mxu0 0.0
    %1008 = vmatpush1.msra.mxu0 %v954
    %1009 = vmatprep.subr.mxu0 0.0
    %1010 = vmatpush2.msra.mxu0 0.0
    %1011 = vmatprep.subr.mxu0 0.0
    %1012 = vmatpush2.msra.mxu0 0.0
    %1013 = vmatprep.subr.mxu0 0.0
    %1014 = vmatpush2.msra.mxu0 0.0
    %1015 = vmatprep.subr.mxu0 0.0
    %1016 = vmatpush2.msra.mxu0 0.0
    %1017 = vmatprep.subr.mxu0 0.0
    %1018 = vmatpush2.msra.mxu0 0.0
    %1019 = vmatprep.subr.mxu0 0.0
    %1020 = vmatpush2.msra.mxu0 0.0
    %1021 = vmatprep.subr.mxu0 0.0
    %1022 = vmatpush2.msra.mxu0 0.0
    %1023 = vmatprep.subr.mxu0 0.0
    %1024 = vmatpush2.msra.mxu0 0.0
    %1025 = vmatprep.subr.mxu0 0.0
    %1026 = vmatpush2.msra.mxu0 0.0
    %1027 = vmatprep.subr.mxu0 0.0
    %1028 = vmatpush2.msra.mxu0 0.0
    %1029 = vmatprep.subr.mxu0 0.0
    %1030 = vmatpush2.msra.mxu0 0.0
    %1031 = vmatprep.subr.mxu0 0.0
    %1032 = vmatpush2.msra.mxu0 0.0
    %1033 = vmatprep.subr.mxu0 0.0
    %1034 = vmatpush2.msra.mxu0 0.0
    %1035 = vmatprep.subr.mxu0 0.0
    %1036 = vmatpush2.msra.mxu0 0.0
    %1037 = vmatprep.subr.mxu0 0.0
    %1038 = vmatpush2.msra.mxu0 0.0
    %1039 = vmatprep.subr.mxu0 0.0
    %1040 = vmatpush2.msra.mxu0 0.0
    %1041 = vmatprep.mubr.f32.mxu0 0.0
    %1042 = vmatmul.mubr.f32.gmra.mxu0 %v953
    %v1043 = vpop.f32.mrf.mxu0
    %v1044 = vadd.f32 %v975, %v1043
    %v1045 = vpop.f32.mrf.mxu0
    %1046 = vdwg.mxu0
    %1047 = vst [vmem:[%s15] sm:$0xff] %v1044
    // Predicated region
    $region66: #{textmlp_forward.1} parent=1 // pred_check
      _
    $region67: #{textmlp_forward.1} parent=1 // pred_check_branch
      %1049 = sbr.rel (0) target = $region69
    $region68: #{textmlp_forward.1} parent=1 // pred_region
      _
    $region69: #{textmlp_forward.1} parent=1 // pred_fallthru
      _
    // Predicated region
    $region70: #{textmlp_forward.1} parent=1 // pred_check
      _
    $region71: #{textmlp_forward.1} parent=1 // pred_check_branch
      %1051 = sbr.rel (0) target = $region73
    $region72: #{textmlp_forward.1} parent=1 // pred_region
      _
    $region73: #{textmlp_forward.1} parent=1 // pred_fallthru
      _
    %1052 = vsyncpa [#allocation3], 1

</llo_original>
